<compile_context>
chip_gen: v6e
topology: v6e:2x2x1
jax: 0.10.0
libtpu: 0.0.40
codegen_flags: <defaults>
</compile_context>

<pallas_src>
import jax
import jax.numpy as jnp
from jax.experimental import pallas as pl
from jax.experimental.pallas import tpu as pltpu


def gcn_glu_kernel(a_ref, x_ref, w1_ref, w2_ref, b1_ref, b2_ref, o_ref, acc_ref):
    nk = pl.program_id(1)                 # N-reduction step (innermost axis)

    @pl.when(nk == 0)
    def _():
        acc_ref[...] = jnp.zeros_like(acc_ref)

    # Single lane-dense MXU matmul: (tv, tn) @ (tn, B*C_in) -> (tv, B*C_in),
    # bf16 operands, f32 accumulation.
    acc_ref[...] += jnp.dot(a_ref[...], x_ref[...],
                            preferred_element_type=jnp.float32)

    @pl.when(nk == pl.num_programs(1) - 1)
    def _():
        ax = acc_ref[...]                 # (tv, B*C_in) f32 -- kept in f32
        # Block-diagonal GLU projections: (tv, B*C_in) @ (B*C_in, B*c_out).
        z1 = jnp.dot(ax, w1_ref[...],
                     preferred_element_type=jnp.float32) + b1_ref[...]
        z2 = jnp.dot(ax, w2_ref[...],
                     preferred_element_type=jnp.float32) + b2_ref[...]
        o_ref[...] = (z1 * jax.nn.sigmoid(z2)).astype(o_ref.dtype)


def _pick_tile(dim, tile, align):
    """Return (tile_size, padded_dim). Use the full dim if it fits one tile."""
    if dim <= tile:
        return dim, dim
    assert tile % align == 0
    padded = ((dim + tile - 1) // tile) * tile
    return tile, padded


def gcn_glu_forward(x, graph_supports, weight, bias, c_out,
                    *, tile_v=512, tile_n=1024):
    """x: (N, B, C_in); graph_supports: (V, N);
    weight: (2*c_out, C_in, 1, 1); bias: (2*c_out,). Returns (B, V, c_out)."""
    N, B, C_in = x.shape
    V, N2 = graph_supports.shape
    assert N2 == N

    # GLU projection weights, kept f32 for the (tiny) epilogue matmuls.
    w = weight.reshape(2 * c_out, C_in).astype(jnp.float32)
    w1 = jnp.transpose(w[:c_out])                          # (C_in, c_out)
    w2 = jnp.transpose(w[c_out:])                          # (C_in, c_out)
    eye = jnp.eye(B, dtype=jnp.float32)
    w1_bd = jnp.kron(eye, w1)                              # (B*C_in, B*c_out)
    w2_bd = jnp.kron(eye, w2)                              # (B*C_in, B*c_out)
    b1 = jnp.tile(bias[:c_out].astype(jnp.float32), B).reshape(1, B * c_out)
    b2 = jnp.tile(bias[c_out:].astype(jnp.float32), B).reshape(1, B * c_out)

    # Flatten batch into the lane dimension (contiguous reshape, no transpose).
    x_flat = x.reshape(N, B * C_in)

    tv, Vp = _pick_tile(V, tile_v, 8)      # sublane-aligned V tile
    tn, Np = _pick_tile(N, tile_n, 128)    # lane-aligned N (reduction) tile

    A = graph_supports
    if (Vp, Np) != (V, N):
        A = jnp.pad(A, ((0, Vp - V), (0, Np - N)))
    if Np != N:
        x_flat = jnp.pad(x_flat, ((0, Np - N), (0, 0)))

    # bf16 matmul operands for the dominant A@X stage; f32 accumulation.
    # (Documented precision choice: ~1e-2-level relative error on large N.)
    A_bf = A.astype(jnp.bfloat16)
    x_bf = x_flat.astype(jnp.bfloat16)

    BC = B * C_in
    BO = B * c_out
    grid = (Vp // tv, Np // tn)

    out = pl.pallas_call(
        gcn_glu_kernel,
        out_shape=jax.ShapeDtypeStruct((Vp, BO), x.dtype),
        grid_spec=pltpu.PrefetchScalarGridSpec(
            num_scalar_prefetch=0,
            grid=grid,
            in_specs=[
                pl.BlockSpec((tv, tn), lambda v, n: (v, n)),   # A tile
                pl.BlockSpec((tn, BC), lambda v, n: (n, 0)),   # x (batch-flat)
                pl.BlockSpec((BC, BO), lambda v, n: (0, 0)),   # block-diag W1
                pl.BlockSpec((BC, BO), lambda v, n: (0, 0)),   # block-diag W2
                pl.BlockSpec((1, BO), lambda v, n: (0, 0)),    # tiled bias1
                pl.BlockSpec((1, BO), lambda v, n: (0, 0)),    # tiled bias2
            ],
            out_specs=pl.BlockSpec((tv, BO), lambda v, n: (v, 0)),
            scratch_shapes=[pltpu.VMEM((tv, BC), jnp.float32)],  # A@X acc
        ),
        compiler_params=pltpu.CompilerParams(
            dimension_semantics=("parallel", "arbitrary"),
            vmem_limit_bytes=48 * 1024 * 1024,
        ),
    )(A_bf, x_bf, w1_bd, w2_bd, b1, b2)

    # Lane-dense (V, B*c_out) slab -> (B, V, c_out); layout plumbing only.
    out = out[:V].reshape(V, B, c_out)
    return jnp.transpose(out, (1, 0, 2))


def gcn_glu_ref(x, A, weight, bias, c_out):
    """Plain-JAX (f32) transcription of the PyTorch forward, for verification."""
    xx = x[..., None]                                # (N, B, C_in, 1)
    xx = jnp.transpose(xx, (1, 2, 0, 3))             # (B, C_in, N, 1)
    ax = jnp.einsum('vn,bfnt->bfvt', A, xx)          # (B, C_in, V, 1)
    w = weight.reshape(2 * c_out, -1)                # (2*C_out, C_in)
    axw = jnp.einsum('of,bfvt->bovt', w, ax) + bias[None, :, None, None]
    a1, a2 = axw[:, :c_out], axw[:, c_out:]
    out = (a1 * jax.nn.sigmoid(a2))[..., 0]          # (B, C_out, V)
    return jnp.transpose(out, (0, 2, 1))             # (B, V, C_out)


if __name__ == "__main__":
    key = jax.random.PRNGKey(0)

    def run_case(case_key, N, V, B, C_in, C_out, **tile_kwargs):
        k1, k2, k3, k4 = jax.random.split(case_key, 4)
        x = jax.random.normal(k1, (N, B, C_in), dtype=jnp.float32)
        # normalized adjacency-like support (keeps magnitudes O(1))
        A = jax.random.normal(k2, (V, N), dtype=jnp.float32) * (N ** -0.5)
        weight = jax.random.normal(k3, (2 * C_out, C_in, 1, 1),
                                   dtype=jnp.float32) * 0.1
        bias = jax.random.normal(k4, (2 * C_out,), dtype=jnp.float32) * 0.1

        out = gcn_glu_forward(x, A, weight, bias, C_out, **tile_kwargs)
        out = jax.block_until_ready(out)
        ref = gcn_glu_ref(x, A, weight, bias, C_out)
        assert out.shape == (B, V, C_out), out.shape
        # bf16 A/x operands -> relaxed tolerance vs the f32 reference
        err = float(jnp.max(jnp.abs(out - ref)))
        assert jnp.allclose(out, ref, atol=5e-2, rtol=5e-2), f"max |err| = {err}"

    k1, k2 = jax.random.split(key)
    # small single-tile case (shapes implied by the module)
    run_case(k1, N=16, V=16, B=2, C_in=4, C_out=8)
    # exercises V tiling, N-reduction accumulator, and V/N zero-padding
    run_case(k2, N=200, V=20, B=3, C_in=4, C_out=8, tile_v=8, tile_n=128)

    print("KERNEL_OK")
</pallas_src>

<mosaic_0001>
module attributes {stable_mosaic.version = 11 : i64} {
  func.func @gcn_glu_kernel(%arg0: i32, %arg1: i32, %arg2: memref<16x16xbf16, #tpu.memory_space<vmem>>, %arg3: memref<16x8xbf16, #tpu.memory_space<vmem>>, %arg4: memref<8x16xf32, #tpu.memory_space<vmem>>, %arg5: memref<8x16xf32, #tpu.memory_space<vmem>>, %arg6: memref<1x16xf32, #tpu.memory_space<vmem>>, %arg7: memref<1x16xf32, #tpu.memory_space<vmem>>, %arg8: memref<16x16xf32, #tpu.memory_space<vmem>>, %arg9: memref<16x8xf32, #tpu.memory_space<vmem>>) attributes {dimension_semantics = [#tpu.dimension_semantics<parallel>, #tpu.dimension_semantics<arbitrary>], iteration_bounds = array<i64: 1, 1>, scalar_prefetch = 0 : i64, scratch_operands = 1 : i64, tpu.core_type = #tpu.core_type<tc>, window_params = [{transform_indices = @transform_0, window_bounds = array<i64: 16, 16>}, {transform_indices = @transform_1, window_bounds = array<i64: 16, 8>}, {pipeline_mode = #tpu.pipeline_mode<synchronous>, transform_indices = @transform_2, window_bounds = array<i64: 8, 16>}, {pipeline_mode = #tpu.pipeline_mode<synchronous>, transform_indices = @transform_3, window_bounds = array<i64: 8, 16>}, {pipeline_mode = #tpu.pipeline_mode<synchronous>, transform_indices = @transform_4, window_bounds = array<i64: 1, 16>}, {pipeline_mode = #tpu.pipeline_mode<synchronous>, transform_indices = @transform_5, window_bounds = array<i64: 1, 16>}, {transform_indices = @transform_6, window_bounds = array<i64: 16, 16>}]} {
    %c0_i32 = arith.constant 0 : i32
    %0 = arith.cmpi eq, %arg1, %c0_i32 : i32
    %1 = arith.extui %0 : i1 to i32
    %c0_i32_0 = arith.constant 0 : i32
    %2 = arith.cmpi ne, %1, %c0_i32_0 : i32
    scf.if %2 {
      %cst_10 = arith.constant 0.000000e+00 : f32
      %12 = vector.broadcast %cst_10 : f32 to vector<16x8xf32>
      %c0_11 = arith.constant 0 : index
      %c0_12 = arith.constant 0 : index
      %13 = vector.load %arg9[%c0_11, %c0_12] : memref<16x8xf32, #tpu.memory_space<vmem>>, vector<16x8xf32>
      tpu.vector_store %arg9[%c0_11, %c0_12], %12 {strides = array<i32>} : memref<16x8xf32, #tpu.memory_space<vmem>>, vector<16x8xf32>,
    } else {
    }
    %c0 = arith.constant 0 : index
    %c0_1 = arith.constant 0 : index
    %3 = vector.load %arg9[%c0, %c0_1] : memref<16x8xf32, #tpu.memory_space<vmem>>, vector<16x8xf32>
    %c0_2 = arith.constant 0 : index
    %c0_3 = arith.constant 0 : index
    %4 = vector.load %arg2[%c0_2, %c0_3] : memref<16x16xbf16, #tpu.memory_space<vmem>>, vector<16x16xbf16>
    %c0_4 = arith.constant 0 : index
    %c0_5 = arith.constant 0 : index
    %5 = vector.load %arg3[%c0_4, %c0_5] : memref<16x8xbf16, #tpu.memory_space<vmem>>, vector<16x8xbf16>
    %cst = arith.constant dense<0.000000e+00> : vector<16x8xf32>
    %6 = tpu.matmul %4, %5, %cst {dimension_numbers = #tpu.dot_dimension_numbers<[1], [0], [0], [1], [0, 0, 1, 1], [], []>} : vector<16x16xbf16>, vector<16x8xbf16>, vector<16x8xf32> -> vector<16x8xf32>
    %7 = arith.addf %3, %6 : vector<16x8xf32>
    %c0_6 = arith.constant 0 : index
    %c0_7 = arith.constant 0 : index
    %8 = vector.load %arg9[%c0_6, %c0_7] : memref<16x8xf32, #tpu.memory_space<vmem>>, vector<16x8xf32>
    tpu.vector_store %arg9[%c0_6, %c0_7], %7 {strides = array<i32>} : memref<16x8xf32, #tpu.memory_space<vmem>>, vector<16x8xf32>,
    %c0_i32_8 = arith.constant 0 : i32
    %9 = arith.cmpi eq, %arg1, %c0_i32_8 : i32
    %10 = arith.extui %9 : i1 to i32
    %c0_i32_9 = arith.constant 0 : i32
    %11 = arith.cmpi ne, %10, %c0_i32_9 : i32
    scf.if %11 {
      %c0_10 = arith.constant 0 : index
      %c0_11 = arith.constant 0 : index
      %12 = vector.load %arg9[%c0_10, %c0_11] : memref<16x8xf32, #tpu.memory_space<vmem>>, vector<16x8xf32>
      %c0_12 = arith.constant 0 : index
      %c0_13 = arith.constant 0 : index
      %13 = vector.load %arg4[%c0_12, %c0_13] : memref<8x16xf32, #tpu.memory_space<vmem>>, vector<8x16xf32>
      %cst_14 = arith.constant dense<0.000000e+00> : vector<16x16xf32>
      %14 = tpu.matmul %12, %13, %cst_14 {dimension_numbers = #tpu.dot_dimension_numbers<[1], [0], [0], [1], [0, 0, 1, 1], [], []>} : vector<16x8xf32>, vector<8x16xf32>, vector<16x16xf32> -> vector<16x16xf32>
      %c0_15 = arith.constant 0 : index
      %c0_16 = arith.constant 0 : index
      %15 = vector.load %arg6[%c0_15, %c0_16] : memref<1x16xf32, #tpu.memory_space<vmem>>, vector<1x16xf32>
      %16 = vector.broadcast %15 : vector<1x16xf32> to vector<16x16xf32>
      %17 = arith.addf %14, %16 : vector<16x16xf32>
      %c0_17 = arith.constant 0 : index
      %c0_18 = arith.constant 0 : index
      %18 = vector.load %arg5[%c0_17, %c0_18] : memref<8x16xf32, #tpu.memory_space<vmem>>, vector<8x16xf32>
      %cst_19 = arith.constant dense<0.000000e+00> : vector<16x16xf32>
      %19 = tpu.matmul %12, %18, %cst_19 {dimension_numbers = #tpu.dot_dimension_numbers<[1], [0], [0], [1], [0, 0, 1, 1], [], []>} : vector<16x8xf32>, vector<8x16xf32>, vector<16x16xf32> -> vector<16x16xf32>
      %c0_20 = arith.constant 0 : index
      %c0_21 = arith.constant 0 : index
      %20 = vector.load %arg7[%c0_20, %c0_21] : memref<1x16xf32, #tpu.memory_space<vmem>>, vector<1x16xf32>
      %21 = vector.broadcast %20 : vector<1x16xf32> to vector<16x16xf32>
      %22 = arith.addf %19, %21 : vector<16x16xf32>
      %23 = arith.negf %22 : vector<16x16xf32>
      %24 = math.exp %23 : vector<16x16xf32>
      %cst_22 = arith.constant 1.000000e+00 : f32
      %25 = vector.broadcast %cst_22 : f32 to vector<16x16xf32>
      %26 = arith.addf %25, %24 : vector<16x16xf32>
      %27 = arith.divf %25, %26 : vector<16x16xf32>
      %28 = arith.mulf %17, %27 : vector<16x16xf32>
      %c0_23 = arith.constant 0 : index
      %c0_24 = arith.constant 0 : index
      %29 = vector.load %arg8[%c0_23, %c0_24] : memref<16x16xf32, #tpu.memory_space<vmem>>, vector<16x16xf32>
      tpu.vector_store %arg8[%c0_23, %c0_24], %28 {strides = array<i32>} : memref<16x16xf32, #tpu.memory_space<vmem>>, vector<16x16xf32>,
    } else {
    }
    return
  }
  func.func @transform_0(%arg0: i32, %arg1: i32) -> (i32, i32) {
    %c0_i32 = arith.constant 0 : i32
    return %arg0, %arg1 : i32, i32
  }
  func.func @transform_1(%arg0: i32, %arg1: i32) -> (i32, i32) {
    %c0_i32 = arith.constant 0 : i32
    %c0_i32_0 = arith.constant 0 : i32
    return %arg1, %c0_i32 : i32, i32
  }
  func.func @transform_2(%arg0: i32, %arg1: i32) -> (i32, i32) {
    %c0_i32 = arith.constant 0 : i32
    %c0_i32_0 = arith.constant 0 : i32
    %c0_i32_1 = arith.constant 0 : i32
    return %c0_i32, %c0_i32_0 : i32, i32
  }
  func.func @transform_3(%arg0: i32, %arg1: i32) -> (i32, i32) {
    %c0_i32 = arith.constant 0 : i32
    %c0_i32_0 = arith.constant 0 : i32
    %c0_i32_1 = arith.constant 0 : i32
    return %c0_i32, %c0_i32_0 : i32, i32
  }
  func.func @transform_4(%arg0: i32, %arg1: i32) -> (i32, i32) {
    %c0_i32 = arith.constant 0 : i32
    %c0_i32_0 = arith.constant 0 : i32
    %c0_i32_1 = arith.constant 0 : i32
    return %c0_i32, %c0_i32_0 : i32, i32
  }
  func.func @transform_5(%arg0: i32, %arg1: i32) -> (i32, i32) {
    %c0_i32 = arith.constant 0 : i32
    %c0_i32_0 = arith.constant 0 : i32
    %c0_i32_1 = arith.constant 0 : i32
    return %c0_i32, %c0_i32_0 : i32, i32
  }
  func.func @transform_6(%arg0: i32, %arg1: i32) -> (i32, i32) {
    %c0_i32 = arith.constant 0 : i32
    %c0_i32_0 = arith.constant 0 : i32
    return %arg0, %c0_i32 : i32, i32
  }
}

</mosaic_0001>

<llo_original>
// kernel: tpu_custom_call.1
$region0: #{tpu_custom_call.1}
  #allocation0 [shape = 'u32[]', space=smem, size = 0x4, offset = 0x4, fixed_abs, tag = 'smem constant byte address 0x4 - core index']
  #allocation1 [shape = 'u32[144,128]{1,0:T(1,128)}', space=vmem, size = 0x12000, scoped, tag = 'internal scratch']
  #allocation2 [shape = 'f32[16,8]{1,0:T(8,128)}', space=vmem, size = 0x2000, scoped, tag = 'scratch operand']
  %s0 = inlined_call_operand.vmem [shape: bf16[16,16], index: 0, kind: input, shape index: {}]
  %s1 = inlined_call_operand.vmem [shape: bf16[16,8], index: 1, kind: input, shape index: {}]
  %s2 = inlined_call_operand.hbm [shape: f32[8,16], index: 2, kind: input, shape index: {}]
  %s3 = inlined_call_operand.vmem [shape: f32[8,16], index: 3, kind: input, shape index: {}]
  %s4 = inlined_call_operand.vmem [shape: f32[1,16], index: 4, kind: input, shape index: {}]
  %s5 = inlined_call_operand.vmem [shape: f32[1,16], index: 5, kind: input, shape index: {}]
  %s6 = inlined_call_operand.hbm [shape: f32[16,16], index: 6, kind: output, shape index: {}]
  %s7 = sld [smem:[#allocation0]]
  $region46: #{tpu_custom_call.1} parent=0
    _
  %s9 = ssub.s32 1, %s7
  %s10 = scalar_select 0, %s9, %s7
  $region1: #{tpu_custom_call.1} parent=0
    #allocation3 [shape = 'u8[4096]{0}', space=vmem, size = 0x1000, scoped, tag = 'input window, operand 2, single buffered']
    #allocation4 [shape = 's32[1]{0}', space=sflag, size = 0x4, scoped, tag = 'scoped memory for tpu_custom_call.1']
    #allocation5 [shape = 's32[1]{0}', space=sflag, size = 0x4, scoped, tag = 'scoped memory for tpu_custom_call.1']
    #allocation6 [shape = 'u8[8192]{0}', space=vmem, size = 0x2000, scoped, tag = 'output window, operand 0, single buffered']
    %11 = vsyncpa [#allocation4], 0
    %12 = vsyncpa [#allocation5], 0
    // Predicated region
    $region2: #{tpu_custom_call.1} parent=1 // pred_check
      _
    $region3: #{tpu_custom_call.1} parent=1 // pred_check_branch
      %14 = sbr.rel (0) target = $region5
    $region4: #{tpu_custom_call.1} parent=1 // pred_region
      _
    $region5: #{tpu_custom_call.1} parent=1 // pred_fallthru
      _
    // Predicated region
    $region6: #{tpu_custom_call.1} parent=1 // pred_check
      _
    $region7: #{tpu_custom_call.1} parent=1 // pred_check_branch
      %16 = sbr.rel (0) target = $region9
    $region8: #{tpu_custom_call.1} parent=1 // pred_region
      _
    $region9: #{tpu_custom_call.1} parent=1 // pred_fallthru
      _
    // Predicated region
    $region10: #{tpu_custom_call.1} parent=1 // pred_check
      _
    $region11: #{tpu_custom_call.1} parent=1 // pred_check_branch
      %18 = sbr.rel (0) target = $region13
    $region12: #{tpu_custom_call.1} parent=1 // pred_region
      %s20 = ssub.s32 128, 128
      %21 = vsyncadd [#allocation4], %s20
      %s23 = sshll.u32 [#allocation3], 4
      %s24 = int_to_ptr.vmem [resolvable:$true] %s23
      %26 = dma.hbm_to_vmem [thread:$0]  %s2, 128, %s24, [#allocation4]
    $region13: #{tpu_custom_call.1} parent=1 // pred_fallthru
      _
    // Predicated region
    $region14: #{tpu_custom_call.1} parent=1 // pred_check
      _
    $region15: #{tpu_custom_call.1} parent=1 // pred_check_branch
      %28 = sbr.rel (0) target = $region17
    $region16: #{tpu_custom_call.1} parent=1 // pred_region
      _
    $region17: #{tpu_custom_call.1} parent=1 // pred_fallthru
      _
    // Predicated region
    $region18: #{tpu_custom_call.1} parent=1 // pred_check
      _
    $region19: #{tpu_custom_call.1} parent=1 // pred_check_branch
      %30 = sbr.rel (0) target = $region21
    $region20: #{tpu_custom_call.1} parent=1 // pred_region
      _
    $region21: #{tpu_custom_call.1} parent=1 // pred_fallthru
      _
    // Predicated region
    $region22: #{tpu_custom_call.1} parent=1 // pred_check
      _
    $region23: #{tpu_custom_call.1} parent=1 // pred_check_branch
      %32 = sbr.rel (0) target = $region25
    $region24: #{tpu_custom_call.1} parent=1 // pred_region
      _
    $region25: #{tpu_custom_call.1} parent=1 // pred_fallthru
      _
    // Predicated region
    $region26: #{tpu_custom_call.1} parent=1 // pred_check
      _
    $region27: #{tpu_custom_call.1} parent=1 // pred_check_branch
      %34 = sbr.rel (0) target = $region29
    $region28: #{tpu_custom_call.1} parent=1 // pred_region
      %35 = dma.done [#allocation4], 128
    $region29: #{tpu_custom_call.1} parent=1 // pred_fallthru
      _
    %p37 = scmp.eq.s32.totalorder 0, 0
    // Predicated region
    $region30: #{tpu_custom_call.1} parent=1 // pred_check
      %p38 = pneg %p37
    $region31: #{tpu_custom_call.1} parent=1 // pred_check_branch
      %40 = sbr.rel (%p38) target = $region33
    $region32: #{tpu_custom_call.1} parent=1 // pred_region
      %vm41 = vcmask 64512
      %42 = vst.msk [vmem:[#allocation2] sm:$0xff] %vm41, 0.0
      %43 = vst.msk [vmem:[#allocation2 + $0x8] sm:$0xff] %vm41, 0.0
    $region33: #{tpu_custom_call.1} parent=1 // pred_fallthru
      _
    %v44 = vld [vmem:[#allocation2] sm:$0xff]
    %v45 = vld [vmem:[#allocation2 + $0x8] sm:$0xff]
    %v46 = vld [vmem:[%s0] sm:$0xf]
    %v47 = vld [vmem:[%s0 + $0x4] sm:$0xf]
    %v48 = vld [vmem:[%s1] sm:$0xf]
    %v49 = vld [vmem:[%s1 + $0x4] sm:$0xf]
    %v52 = vunpack.c.l.b16 %v46
    %v53 = vunpack.c.l.b16 %v47
    %v54 = vpack.c.b16 %v53, %v52
    %v57 = vunpack.c.l.b16 %v48
    %v58 = vunpack.c.l.b16 %v49
    %v59 = vpack.c.b16 %v58, %v57
    %vm61 = vcmask 130048
    %v63 = vsel %vm61, %v54, 0
    %65 = vmatprep.subr.bf16.mxu0 0
    %66 = vmatpush1.bf16.msra.mxu0 0
    %67 = vmatprep.subr.bf16.mxu0 0
    %68 = vmatpush1.bf16.msra.mxu0 0
    %69 = vmatprep.subr.bf16.mxu0 0
    %70 = vmatpush1.bf16.msra.mxu0 0
    %71 = vmatprep.subr.bf16.mxu0 0
    %72 = vmatpush1.bf16.msra.mxu0 0
    %73 = vmatprep.subr.bf16.mxu0 0
    %74 = vmatpush1.bf16.msra.mxu0 0
    %75 = vmatprep.subr.bf16.mxu0 0
    %76 = vmatpush1.bf16.msra.mxu0 0
    %77 = vmatprep.subr.bf16.mxu0 0
    %78 = vmatpush1.bf16.msra.mxu0 0
    %79 = vmatprep.subr.bf16.mxu0 0
    %80 = vmatpush1.bf16.msra.mxu0 %v59
    %81 = vmatprep.subr.bf16.mxu0 0
    %82 = vmatpush2.bf16.msra.mxu0 0
    %83 = vmatprep.subr.bf16.mxu0 0
    %84 = vmatpush2.bf16.msra.mxu0 0
    %85 = vmatprep.subr.bf16.mxu0 0
    %86 = vmatpush2.bf16.msra.mxu0 0
    %87 = vmatprep.subr.bf16.mxu0 0
    %88 = vmatpush2.bf16.msra.mxu0 0
    %89 = vmatprep.subr.bf16.mxu0 0
    %90 = vmatpush2.bf16.msra.mxu0 0
    %91 = vmatprep.subr.bf16.mxu0 0
    %92 = vmatpush2.bf16.msra.mxu0 0
    %93 = vmatprep.subr.bf16.mxu0 0
    %94 = vmatpush2.bf16.msra.mxu0 0
    %95 = vmatprep.subr.bf16.mxu0 0
    %96 = vmatpush2.bf16.msra.mxu0 0
    %97 = vmatprep.mubr.bf16.mxu0 0
    %98 = vmatmul.mubr.bf16.gmra.mxu0 %v63
    %v99 = vpop.f32.mrf.mxu0
    %v100 = vadd.f32 0.0, %v99
    %v101 = vpop.f32.mrf.mxu0
    %v102 = vpop.f32.mrf.mxu0
    %v103 = vadd.f32 0.0, %v102
    %v104 = vpop.f32.mrf.mxu0
    %105 = vdwg.mxu0
    %v106 = vadd.f32 %v44, %v100
    %v107 = vadd.f32 %v45, %v103
    %vm108 = vcmask 64512
    %109 = vst.msk [vmem:[#allocation2] sm:$0xff] %vm108, %v106
    %110 = vst.msk [vmem:[#allocation2 + $0x8] sm:$0xff] %vm108, %v107
    // Predicated region
    $region34: #{tpu_custom_call.1} parent=1 // pred_check
      %p111 = pneg %p37
    $region35: #{tpu_custom_call.1} parent=1 // pred_check_branch
      %113 = sbr.rel (%p111) target = $region37
    $region36: #{tpu_custom_call.1} parent=1 // pred_region
      %v114 = vld [vmem:[#allocation2] sm:$0xff]
      %v115 = vld [vmem:[#allocation2 + $0x8] sm:$0xff]
      %v116 = vld [vmem:[#allocation3] sm:$0xff]
      %v117 = vld [vmem:[%s4] sm:$0x1]
      %v119 = vlaneseq
      %v120 = vshrl.u32 %v119, 7
      %v121 = vsub.s32 0, %v120
      %v122 = vrot.slane %v117, %v121
      %v125 = vsel %vm108, %v114, 0
      %v128 = vsel %vm108, %v115, 0
      %130 = vmatprep.subr.mxu0 0.0
      %131 = vmatpush1.msra.mxu0 0.0
      %132 = vmatprep.subr.mxu0 0.0
      %133 = vmatpush1.msra.mxu0 0.0
      %134 = vmatprep.subr.mxu0 0.0
      %135 = vmatpush1.msra.mxu0 0.0
      %136 = vmatprep.subr.mxu0 0.0
      %137 = vmatpush1.msra.mxu0 0.0
      %138 = vmatprep.subr.mxu0 0.0
      %139 = vmatpush1.msra.mxu0 0.0
      %140 = vmatprep.subr.mxu0 0.0
      %141 = vmatpush1.msra.mxu0 0.0
      %142 = vmatprep.subr.mxu0 0.0
      %143 = vmatpush1.msra.mxu0 0.0
      %144 = vmatprep.subr.mxu0 0.0
      %145 = vmatpush1.msra.mxu0 0.0
      %146 = vmatprep.subr.mxu0 0.0
      %147 = vmatpush1.msra.mxu0 0.0
      %148 = vmatprep.subr.mxu0 0.0
      %149 = vmatpush1.msra.mxu0 0.0
      %150 = vmatprep.subr.mxu0 0.0
      %151 = vmatpush1.msra.mxu0 0.0
      %152 = vmatprep.subr.mxu0 0.0
      %153 = vmatpush1.msra.mxu0 0.0
      %154 = vmatprep.subr.mxu0 0.0
      %155 = vmatpush1.msra.mxu0 0.0
      %156 = vmatprep.subr.mxu0 0.0
      %157 = vmatpush1.msra.mxu0 0.0
      %158 = vmatprep.subr.mxu0 0.0
      %159 = vmatpush1.msra.mxu0 0.0
      %160 = vmatprep.subr.mxu0 0.0
      %161 = vmatpush1.msra.mxu0 %v116
      %162 = vmatprep.subr.mxu0 0.0
      %163 = vmatpush2.msra.mxu0 0.0
      %164 = vmatprep.subr.mxu0 0.0
      %165 = vmatpush2.msra.mxu0 0.0
      %166 = vmatprep.subr.mxu0 0.0
      %167 = vmatpush2.msra.mxu0 0.0
      %168 = vmatprep.subr.mxu0 0.0
      %169 = vmatpush2.msra.mxu0 0.0
      %170 = vmatprep.subr.mxu0 0.0
      %171 = vmatpush2.msra.mxu0 0.0
      %172 = vmatprep.subr.mxu0 0.0
      %173 = vmatpush2.msra.mxu0 0.0
      %174 = vmatprep.subr.mxu0 0.0
      %175 = vmatpush2.msra.mxu0 0.0
      %176 = vmatprep.subr.mxu0 0.0
      %177 = vmatpush2.msra.mxu0 0.0
      %178 = vmatprep.subr.mxu0 0.0
      %179 = vmatpush2.msra.mxu0 0.0
      %180 = vmatprep.subr.mxu0 0.0
      %181 = vmatpush2.msra.mxu0 0.0
      %182 = vmatprep.subr.mxu0 0.0
      %183 = vmatpush2.msra.mxu0 0.0
      %184 = vmatprep.subr.mxu0 0.0
      %185 = vmatpush2.msra.mxu0 0.0
      %186 = vmatprep.subr.mxu0 0.0
      %187 = vmatpush2.msra.mxu0 0.0
      %188 = vmatprep.subr.mxu0 0.0
      %189 = vmatpush2.msra.mxu0 0.0
      %190 = vmatprep.subr.mxu0 0.0
      %191 = vmatpush2.msra.mxu0 0.0
      %192 = vmatprep.subr.mxu0 0.0
      %193 = vmatpush2.msra.mxu0 0.0
      %194 = vmatprep.mubr.f32.mxu0 0.0
      %195 = vmatmul.mubr.f32.gmra.mxu0 %v125
      %v196 = vpop.f32.mrf.mxu0
      %v197 = vadd.f32 %v122, %v196
      %v198 = vpop.f32.mrf.mxu0
      %199 = vmatprep.mubr.f32.mxu0 0.0
      %200 = vmatmul.mubr.f32.gmra.mxu0 %v128
      %v201 = vpop.f32.mrf.mxu0
      %v202 = vadd.f32 %v122, %v201
      %v203 = vpop.f32.mrf.mxu0
      %204 = vdwg.mxu0
      %v205 = vld [vmem:[%s3] sm:$0xff]
      %v206 = vld [vmem:[%s5] sm:$0x1]
      %v208 = vlaneseq
      %v209 = vshrl.u32 %v208, 7
      %v210 = vsub.s32 0, %v209
      %v211 = vrot.slane %v206, %v210
      %213 = vmatprep.subr.mxu0 0.0
      %214 = vmatpush1.msra.mxu0 0.0
      %215 = vmatprep.subr.mxu0 0.0
      %216 = vmatpush1.msra.mxu0 0.0
      %217 = vmatprep.subr.mxu0 0.0
      %218 = vmatpush1.msra.mxu0 0.0
      %219 = vmatprep.subr.mxu0 0.0
      %220 = vmatpush1.msra.mxu0 0.0
      %221 = vmatprep.subr.mxu0 0.0
      %222 = vmatpush1.msra.mxu0 0.0
      %223 = vmatprep.subr.mxu0 0.0
      %224 = vmatpush1.msra.mxu0 0.0
      %225 = vmatprep.subr.mxu0 0.0
      %226 = vmatpush1.msra.mxu0 0.0
      %227 = vmatprep.subr.mxu0 0.0
      %228 = vmatpush1.msra.mxu0 0.0
      %229 = vmatprep.subr.mxu0 0.0
      %230 = vmatpush1.msra.mxu0 0.0
      %231 = vmatprep.subr.mxu0 0.0
      %232 = vmatpush1.msra.mxu0 0.0
      %233 = vmatprep.subr.mxu0 0.0
      %234 = vmatpush1.msra.mxu0 0.0
      %235 = vmatprep.subr.mxu0 0.0
      %236 = vmatpush1.msra.mxu0 0.0
      %237 = vmatprep.subr.mxu0 0.0
      %238 = vmatpush1.msra.mxu0 0.0
      %239 = vmatprep.subr.mxu0 0.0
      %240 = vmatpush1.msra.mxu0 0.0
      %241 = vmatprep.subr.mxu0 0.0
      %242 = vmatpush1.msra.mxu0 0.0
      %243 = vmatprep.subr.mxu0 0.0
      %244 = vmatpush1.msra.mxu0 %v205
      %245 = vmatprep.subr.mxu0 0.0
      %246 = vmatpush2.msra.mxu0 0.0
      %247 = vmatprep.subr.mxu0 0.0
      %248 = vmatpush2.msra.mxu0 0.0
      %249 = vmatprep.subr.mxu0 0.0
      %250 = vmatpush2.msra.mxu0 0.0
      %251 = vmatprep.subr.mxu0 0.0
      %252 = vmatpush2.msra.mxu0 0.0
      %253 = vmatprep.subr.mxu0 0.0
      %254 = vmatpush2.msra.mxu0 0.0
      %255 = vmatprep.subr.mxu0 0.0
      %256 = vmatpush2.msra.mxu0 0.0
      %257 = vmatprep.subr.mxu0 0.0
      %258 = vmatpush2.msra.mxu0 0.0
      %259 = vmatprep.subr.mxu0 0.0
      %260 = vmatpush2.msra.mxu0 0.0
      %261 = vmatprep.subr.mxu0 0.0
      %262 = vmatpush2.msra.mxu0 0.0
      %263 = vmatprep.subr.mxu0 0.0
      %264 = vmatpush2.msra.mxu0 0.0
      %265 = vmatprep.subr.mxu0 0.0
      %266 = vmatpush2.msra.mxu0 0.0
      %267 = vmatprep.subr.mxu0 0.0
      %268 = vmatpush2.msra.mxu0 0.0
      %269 = vmatprep.subr.mxu0 0.0
      %270 = vmatpush2.msra.mxu0 0.0
      %271 = vmatprep.subr.mxu0 0.0
      %272 = vmatpush2.msra.mxu0 0.0
      %273 = vmatprep.subr.mxu0 0.0
      %274 = vmatpush2.msra.mxu0 0.0
      %275 = vmatprep.subr.mxu0 0.0
      %276 = vmatpush2.msra.mxu0 0.0
      %277 = vmatprep.mubr.f32.mxu0 0.0
      %278 = vmatmul.mubr.f32.gmra.mxu0 %v125
      %v279 = vpop.f32.mrf.mxu0
      %v280 = vadd.f32 %v211, %v279
      %v281 = vpop.f32.mrf.mxu0
      %282 = vmatprep.mubr.f32.mxu0 0.0
      %283 = vmatmul.mubr.f32.gmra.mxu0 %v128
      %v284 = vpop.f32.mrf.mxu0
      %v285 = vadd.f32 %v211, %v284
      %v286 = vpop.f32.mrf.mxu0
      %287 = vdwg.mxu0
      %v288 = vxor.u32 %v280, 2147483648
      %v289 = vxor.u32 %v285, 2147483648
      %v290 = vmul.f32 %v288, 1.442695
      %v291 = vpow.pop %v290
      %v292 = vmul.f32 %v289, 1.442695
      %v293 = vpow.pop %v292
      %v294 = vadd.f32 %v291, 1.0
      %v295 = vadd.f32 %v293, 1.0
      %v296 = vrcp.pop %v294
      %v297 = vmul.f32 1.0, %v296
      %v298 = vrcp.pop %v295
      %v299 = vmul.f32 1.0, %v298
      %v300 = vmul.f32 %v197, %v297
      %v301 = vmul.f32 %v202, %v299
      %302 = vst.msk [vmem:[#allocation6] sm:$0xff] %vm61, %v300
      %303 = vst.msk [vmem:[#allocation6 + $0x8] sm:$0xff] %vm61, %v301
    $region37: #{tpu_custom_call.1} parent=1 // pred_fallthru
      _
    // Predicated region
    $region38: #{tpu_custom_call.1} parent=1 // pred_check
      _
    $region39: #{tpu_custom_call.1} parent=1 // pred_check_branch
      %305 = sbr.rel (0) target = $region41
    $region40: #{tpu_custom_call.1} parent=1 // pred_region
      %s307 = ssub.s32 256, 256
      %308 = vsyncadd [#allocation5], %s307
      %s309 = sshll.u32 [#allocation6], 4
      %s310 = int_to_ptr.vmem [resolvable:$true] %s309
      %315 = dma.vmem_to_hbm [thread:$0]  %s310, 256, %s6, [#allocation5], 128, 128, 8
    $region41: #{tpu_custom_call.1} parent=1 // pred_fallthru
      _
    // Predicated region
    $region42: #{tpu_custom_call.1} parent=1 // pred_check
      _
    $region43: #{tpu_custom_call.1} parent=1 // pred_check_branch
      %317 = sbr.rel (0) target = $region45
    $region44: #{tpu_custom_call.1} parent=1 // pred_region
      %318 = dma.done [#allocation5], 256
    $region45: #{tpu_custom_call.1} parent=1 // pred_fallthru
      _
    %319 = vsyncpa [#allocation4], 1
    %320 = vsyncpa [#allocation5], 1

</llo_original>
